<compile_context>
chip_gen: v7x
topology: tpu7x:2x2x1
jax: 0.10.0
libtpu: 0.0.40
codegen_flags: <defaults>
</compile_context>

<pallas_src>
from functools import partial

import jax
import jax.numpy as jnp
from jax.experimental import pallas as pl
from jax.experimental.pallas import tpu as pltpu

_LANE = 128
_SUBLANE = 8
_TARGET_GRID_STEPS = 8          # keep both v7x TensorCores busy & balanced
_VMEM_LIMIT_BYTES = 48 << 20    # fits v7x's 64 MiB physical VMEM with headroom


def _round_up(a, m):
    return ((a + m - 1) // m) * m


def _hswish_kernel(x_ref, o_ref):
    x = x_ref[...]
    # Compute in f32 regardless of input dtype: the VPU has huge slack in this
    # HBM-bound kernel, and it keeps bf16 results close to an f32 reference
    # near the clamp boundaries.  For f32 inputs the casts are no-ops.
    xf = x.astype(jnp.float32)
    r6 = jnp.minimum(jnp.maximum(xf + 3.0, 0.0), 6.0)   # relu6(x + 3)
    o_ref[...] = (xf * r6 * (1.0 / 6.0)).astype(o_ref.dtype)


def _hswish_jnp(x):
    # Plain fused fallback for tiny unaligned tails.
    xf = x.astype(jnp.float32)
    return (xf * jnp.clip(xf + 3.0, 0.0, 6.0) * (1.0 / 6.0)).astype(x.dtype)


def _hswish_2d(x2d, block_rows, inplace):
    rows = x2d.shape[0]  # always a multiple of 8 here
    # Aim for >= _TARGET_GRID_STEPS roughly-equal grid steps so the "parallel"
    # grid axis actually shards across v7x's 2 TensorCores.  Round the tile to
    # a multiple of 32 rows (keeps bf16/int8 sublane packing legal), then
    # clamp to the array extent (rows is a multiple of 8, so either case
    # satisfies the (8,128) block constraint).
    tile_rows = min(block_rows, _round_up(pl.cdiv(rows, _TARGET_GRID_STEPS), 32))
    tile_rows = min(tile_rows, rows)
    grid = (pl.cdiv(rows, tile_rows),)  # partial last block handled by Pallas
    return pl.pallas_call(
        _hswish_kernel,
        out_shape=jax.ShapeDtypeStruct((rows, _LANE), x2d.dtype),
        grid=grid,
        in_specs=[pl.BlockSpec((tile_rows, _LANE), lambda i: (i, 0))],
        out_specs=pl.BlockSpec((tile_rows, _LANE), lambda i: (i, 0)),
        input_output_aliases=({0: 0} if inplace else {}),
        compiler_params=pltpu.CompilerParams(
            dimension_semantics=("parallel",),       # megacore sharding on v7x
            vmem_limit_bytes=_VMEM_LIMIT_BYTES,
        ),
    )(x2d)


@partial(jax.jit, static_argnames=("target_block_bytes", "inplace"))
def hswish(x, *, target_block_bytes=8 * 1024 * 1024, inplace=False):
    """Elementwise hard-swish on an arbitrarily shaped float array (NCHW here).

    target_block_bytes: bytes per VMEM block (per buffer).  8 MiB keeps the
      ~0.35 us per-grid-step overhead <10% of step time even at v7x's
      3.2 TB/s HBM; with 2x in + 2x out double-buffering that is 32 MiB of
      VMEM, covered by the explicit 48 MiB scoped-VMEM limit.
    inplace: set input_output_aliases={0: 0} so the output reuses x's HBM
      buffer.  Only enable when x is donated at the jit boundary; otherwise
      XLA inserts a defensive copy (extra HBM traffic).
    """
    orig_shape = x.shape
    n = x.size
    if n == 0:
        return x
    chunk = _SUBLANE * _LANE  # 1024 elements
    itemsize = jnp.dtype(x.dtype).itemsize
    # Dtype-aware block rows: constant byte-sized blocks across f32/bf16/int8,
    # rounded down to a multiple of 32 rows for sublane-packing legality.
    block_rows = max(32, (target_block_bytes // (_LANE * itemsize)) // 32 * 32)

    if n % chunk == 0:
        # Fast path (typical conv activations): pure reshape in / reshape out.
        rows = n // _LANE
        out2d = _hswish_2d(x.reshape(rows, _LANE), block_rows, inplace)
        return out2d.reshape(orig_shape)

    # Unaligned element count: run the kernel only on the 1024-aligned prefix
    # and handle the <= 1023-element tail with plain fused jnp.  (The final
    # concatenate re-copies the prefix once; still far cheaper than the old
    # full-tensor pad + slice path, and this case never occurs for standard
    # MobileNetV3 activation shapes.)
    x_flat = x.reshape(-1)
    n_main = (n // chunk) * chunk
    tail_y = _hswish_jnp(x_flat[n_main:])
    if n_main == 0:
        return tail_y.reshape(orig_shape)
    head2d = _hswish_2d(
        x_flat[:n_main].reshape(n_main // _LANE, _LANE), block_rows, inplace=False
    )
    return jnp.concatenate([head2d.reshape(-1), tail_y]).reshape(orig_shape)


def hswish_reference(x):
    return x * jnp.clip(x + 3.0, 0.0, 6.0) / 6.0


if __name__ == "__main__":
    key = jax.random.PRNGKey(0)
    k0, k1 = jax.random.split(key)

    # NCHW, as produced by the convs feeding this activation in MobileNetV3.
    x = jax.random.normal(k0, (2, 4, 16, 16), dtype=jnp.float32) * 4.0
    y = hswish(x)
    jax.block_until_ready(y)
    y_ref = hswish_reference(x)
    assert y.shape == x.shape and y.dtype == x.dtype
    assert jnp.allclose(y, y_ref, atol=1e-6, rtol=1e-6), "mismatch vs reference"

    # Exercise the unaligned-tail path (1734 elems: 1024 via kernel, 710 via jnp).
    x_odd = jax.random.normal(k1, (2, 3, 17, 17), dtype=jnp.float32) * 4.0
    y_odd = hswish(x_odd)
    jax.block_until_ready(y_odd)
    assert y_odd.shape == x_odd.shape and y_odd.dtype == x_odd.dtype
    assert jnp.allclose(y_odd, hswish_reference(x_odd), atol=1e-6, rtol=1e-6), (
        "mismatch vs reference (unaligned path)"
    )

    print("KERNEL_OK")
</pallas_src>

<mosaic_0001>
module attributes {stable_mosaic.version = 11 : i64} {
  func.func @_hswish_kernel(%arg0: i32, %arg1: memref<16x128xf32, #tpu.memory_space<vmem>>, %arg2: memref<16x128xf32, #tpu.memory_space<vmem>>) attributes {dimension_semantics = [#tpu.dimension_semantics<parallel>], iteration_bounds = array<i64: 1>, scalar_prefetch = 0 : i64, scratch_operands = 0 : i64, tpu.core_type = #tpu.core_type<tc>, window_params = [{transform_indices = @transform_0, window_bounds = array<i64: 16, 128>}, {transform_indices = @transform_1, window_bounds = array<i64: 16, 128>}]} {
    %c0 = arith.constant 0 : index
    %c0_0 = arith.constant 0 : index
    %0 = vector.load %arg1[%c0, %c0_0] : memref<16x128xf32, #tpu.memory_space<vmem>>, vector<16x128xf32>
    %cst = arith.constant 3.000000e+00 : f32
    %1 = vector.broadcast %cst : f32 to vector<16x128xf32>
    %2 = arith.addf %0, %1 : vector<16x128xf32>
    %cst_1 = arith.constant 0.000000e+00 : f32
    %3 = vector.broadcast %cst_1 : f32 to vector<16x128xf32>
    %4 = arith.maximumf %2, %3 : vector<16x128xf32>
    %cst_2 = arith.constant 6.000000e+00 : f32
    %5 = vector.broadcast %cst_2 : f32 to vector<16x128xf32>
    %6 = arith.minimumf %4, %5 : vector<16x128xf32>
    %7 = arith.mulf %0, %6 : vector<16x128xf32>
    %cst_3 = arith.constant 0.166666672 : f32
    %8 = vector.broadcast %cst_3 : f32 to vector<16x128xf32>
    %9 = arith.mulf %7, %8 : vector<16x128xf32>
    %c0_4 = arith.constant 0 : index
    %c0_5 = arith.constant 0 : index
    %10 = vector.load %arg2[%c0_4, %c0_5] : memref<16x128xf32, #tpu.memory_space<vmem>>, vector<16x128xf32>
    tpu.vector_store %arg2[%c0_4, %c0_5], %9 {strides = array<i32>} : memref<16x128xf32, #tpu.memory_space<vmem>>, vector<16x128xf32>,
    return
  }
  func.func @transform_0(%arg0: i32) -> (i32, i32) {
    %c0_i32 = arith.constant 0 : i32
    %c0_i32_0 = arith.constant 0 : i32
    return %arg0, %c0_i32 : i32, i32
  }
  func.func @transform_1(%arg0: i32) -> (i32, i32) {
    %c0_i32 = arith.constant 0 : i32
    %c0_i32_0 = arith.constant 0 : i32
    return %arg0, %c0_i32 : i32, i32
  }
}

</mosaic_0001>

<llo_original>
// kernel: hswish.1
$region0: #{hswish.1}
  #allocation0 [shape = 'u32[]', space=smem, size = 0x4, offset = 0x4, fixed_abs, tag = 'smem constant byte address 0x4 - core index']
  #allocation1 [shape = 'u32[144,128]{1,0:T(1,128)}', space=vmem, size = 0x12000, scoped, tag = 'internal scratch']
  %s0 = inlined_call_operand.vmem [shape: f32[16,128], index: 0, kind: input, shape index: {}]
  %s1 = inlined_call_operand.vmem [shape: f32[16,128], index: 1, kind: output, shape index: {}]
  %s2 = sld [smem:[#allocation0]]
  $region14: #{hswish.1} parent=0
    _
  %s4 = ssub.s32 1, %s2
  %s5 = scalar_select 0, %s4, %s2
  // Predicated region
  $region2: #{hswish.1} parent=0 // pred_check
    _
  $region3: #{hswish.1} parent=0 // pred_check_branch
    %7 = sbr.rel (0) target = $region5
  $region4: #{hswish.1} parent=0 // pred_region
    _
  $region5: #{hswish.1} parent=0 // pred_fallthru
    _
  %v8 = vld [vmem:[%s0] sm:$0xff]
  %v9 = vld [vmem:[%s0 + $0x8] sm:$0xff]
  %v10 = vadd.f32 %v8, 3.0
  %v11 = vadd.f32 %v9, 3.0
  %v12 = vmax.f32 %v10, 0.0
  %v13 = vmax.f32 %v11, 0.0
  %v14 = vmin.f32 %v12, 6.0
  %v15 = vmin.f32 %v13, 6.0
  %v16 = vmul.f32 %v8, %v14
  %v17 = vmul.f32 %v9, %v15
  %v18 = vmul.f32 %v16, 0.16666667
  %v19 = vmul.f32 %v17, 0.16666667
  %20 = vst [vmem:[%s1] sm:$0xff] %v18
  %21 = vst [vmem:[%s1 + $0x8] sm:$0xff] %v19
  // Predicated region
  $region6: #{hswish.1} parent=0 // pred_check
    _
  $region7: #{hswish.1} parent=0 // pred_check_branch
    %23 = sbr.rel (0) target = $region9
  $region8: #{hswish.1} parent=0 // pred_region
    _
  $region9: #{hswish.1} parent=0 // pred_fallthru
    _
  // Predicated region
  $region10: #{hswish.1} parent=0 // pred_check
    _
  $region11: #{hswish.1} parent=0 // pred_check_branch
    %25 = sbr.rel (0) target = $region13
  $region12: #{hswish.1} parent=0 // pred_region
    _
  $region13: #{hswish.1} parent=0 // pred_fallthru
    _

</llo_original>
